<compile_context>
chip_gen: v7x
topology: tpu7x:2x2x1
jax: 0.10.0
libtpu: 0.0.40
codegen_flags: <defaults>
</compile_context>

<pallas_src>
import functools

import jax
import jax.numpy as jnp
from jax.experimental import pallas as pl
from jax.experimental.pallas import tpu as pltpu


def _cw_loss_kernel(conf_ref, logits_ref, target_ref, out_ref, *, total_rows):
    x = logits_ref[...]                          # (TB, C), native dtype (bf16/f32)
    t = target_ref[...]                          # (TB, 1) int32
    tb, c = x.shape

    # One-hot via broadcasted-iota compare; selects instead of float-mask muls.
    class_ids = jax.lax.broadcasted_iota(jnp.int32, (tb, c), 1)
    is_target = class_ids == t                                       # (TB, C) bool

    zero = jnp.zeros((), dtype=x.dtype)
    # Row reductions in native dtype (exact: single selected element / max),
    # then cast the tiny (TB, 1) results to f32 for the margin math.
    correct = jnp.sum(jnp.where(is_target, x, zero),
                      axis=1, keepdims=True).astype(jnp.float32)
    # Matches the reference exactly: true-class entry is zeroed (not -inf).
    wrong = jnp.max(jnp.where(is_target, zero, x),
                    axis=1, keepdims=True).astype(jnp.float32)

    conf = conf_ref[0]                                               # SMEM f32 scalar
    margin = jnp.maximum(correct - wrong + conf, 0.0)                # (TB, 1)

    if total_rows is not None:  # static branch: only when B % tb != 0
        # Ragged last block: padded rows hold garbage -> select 0.0 for them.
        row_ids = (pl.program_id(0) * tb
                   + jax.lax.broadcasted_iota(jnp.int32, (tb, 1), 0))
        margin = jnp.where(row_ids < total_rows, margin, 0.0)

    partial = -jnp.sum(margin)
    # Lane-dense (1, 1, 128) partial store; wrapper reads [:, 0, 0].
    out_ref[...] = jnp.full(out_ref.shape, partial, dtype=out_ref.dtype)


def _choose_params(batch, num_classes, itemsize):
    """Pick (block_rows, vmem_limit_bytes) from the device's VMEM capacity."""
    # Lane-padded class count so the VMEM estimate is honest for C < 128.
    c_pad = max(128, ((num_classes + 127) // 128) * 128)

    try:
        info = pltpu.get_tpu_info()
        vmem_cap = int(getattr(info, "vmem_capacity_bytes", 64 * 1024 * 1024))
    except Exception:
        vmem_cap = 64 * 1024 * 1024                   # conservative fallback

    if vmem_cap <= 64 * 1024 * 1024:                  # v7x-class: 64 MiB VMEM
        max_tile_bytes = 6 * 1024 * 1024
        vmem_limit = 48 * 1024 * 1024
    else:                                             # v5e / v6e: 128 MiB VMEM
        max_tile_bytes = 12 * 1024 * 1024
        vmem_limit = 64 * 1024 * 1024

    if batch <= 8:
        # Single block equal to the full (tiny) batch dim.
        return batch, vmem_limit

    # Byte-budget cap (input tile; intermediates stay in native dtype too).
    rows_bytes = max(8, (max_tile_bytes // max(1, c_pad * itemsize)) // 8 * 8)
    # Keep roughly >= 8 grid steps when the batch allows it (pipeline depth +
    # megacore sharding); never collapse to a single full-batch block.
    rows_steps = max(8, (pl.cdiv(batch, 8) // 8) * 8)
    return min(rows_bytes, rows_steps), vmem_limit


def carlini_wagner_loss(logits, target, conf=50.0, block_rows=None):
    """logits: (B, C) float (any float dtype), target: (B,) int. Scalar f32 loss."""
    B, C = logits.shape
    target = target.astype(jnp.int32).reshape(B, 1)
    conf_arr = jnp.asarray(conf, dtype=jnp.float32).reshape(1)

    itemsize = jnp.dtype(logits.dtype).itemsize
    tb, vmem_limit = _choose_params(B, C, itemsize)
    if block_rows is not None:
        tb = min(int(block_rows), max(B, 8))

    grid = pl.cdiv(B, tb)
    total_rows = B if (B % tb) != 0 else None   # mask only when last block ragged

    partials = pl.pallas_call(
        functools.partial(_cw_loss_kernel, total_rows=total_rows),
        out_shape=jax.ShapeDtypeStruct((grid, 1, 128), jnp.float32),
        grid=(grid,),
        in_specs=[
            pl.BlockSpec(memory_space=pltpu.MemorySpace.SMEM),  # conf scalar
            pl.BlockSpec((tb, C), lambda i: (i, 0)),            # logits tile (native dtype)
            pl.BlockSpec((tb, 1), lambda i: (i, 0)),            # matching target tile
        ],
        out_specs=pl.BlockSpec((1, 1, 128), lambda i: (i, 0, 0)),
        compiler_params=pltpu.CompilerParams(
            dimension_semantics=("parallel",),                  # megacore sharding on v7x
            vmem_limit_bytes=vmem_limit,
        ),
    )(conf_arr, logits, target)
    return jnp.sum(partials[:, 0, 0])


def _reference_cw_loss(logits, target, conf=50.0):
    """Plain-JAX reference mirroring the PyTorch module, for validation."""
    C = logits.shape[1]
    x = logits.astype(jnp.float32)
    mask = jax.nn.one_hot(target, C, dtype=jnp.float32)
    correct = jnp.sum(mask * x, axis=1)
    wrong = jnp.max((1.0 - mask) * x, axis=1)
    return -jnp.sum(jax.nn.relu(correct - wrong + conf))


if __name__ == "__main__":
    key = jax.random.PRNGKey(0)
    k1, k2, k3, k4 = jax.random.split(key, 4)

    # Case 1: small single-block case (B=8, C=16), f32 logits, auto tiling.
    B, C = 8, 16
    logits = jax.random.normal(k1, (B, C), dtype=jnp.float32) * 5.0
    target = jax.random.randint(k2, (B,), 0, C, dtype=jnp.int32)
    loss = jax.block_until_ready(carlini_wagner_loss(logits, target, conf=50.0))
    ref = _reference_cw_loss(logits, target, conf=50.0)
    assert jnp.allclose(loss, ref, rtol=1e-5, atol=1e-4), (loss, ref)

    # Case 2: exercises the batch grid, the no-pad ragged last block + row
    # masking, bf16-native in-kernel math, and the SMEM conf scalar
    # (B=20, TB=8 -> grid of 3 blocks, 4 garbage rows in the last block).
    B2, C2 = 20, 32
    logits2 = (jax.random.normal(k3, (B2, C2), dtype=jnp.float32) * 5.0
               ).astype(jnp.bfloat16)
    target2 = jax.random.randint(k4, (B2,), 0, C2, dtype=jnp.int32)
    loss2 = jax.block_until_ready(
        carlini_wagner_loss(logits2, target2, conf=30.0, block_rows=8))
    ref2 = _reference_cw_loss(logits2, target2, conf=30.0)
    assert jnp.allclose(loss2, ref2, rtol=1e-3, atol=1e-2), (loss2, ref2)

    print("KERNEL_OK")
</pallas_src>

<mosaic_0001>
module attributes {stable_mosaic.version = 11 : i64} {
  func.func @_cw_loss_kernel(%arg0: i32, %arg1: memref<1xf32, #tpu.memory_space<smem>>, %arg2: memref<8x16xf32, #tpu.memory_space<vmem>>, %arg3: memref<8x1xi32, #tpu.memory_space<vmem>>, %arg4: memref<1x1x128xf32, #tpu.memory_space<vmem>>) attributes {dimension_semantics = [#tpu.dimension_semantics<parallel>], iteration_bounds = array<i64: 1>, scalar_prefetch = 0 : i64, scratch_operands = 0 : i64, tpu.core_type = #tpu.core_type<tc>, window_params = [{transform_indices = @transform_0, window_bounds = array<i64: 1>}, {transform_indices = @transform_1, window_bounds = array<i64: 8, 16>}, {transform_indices = @transform_2, window_bounds = array<i64: 8, 1>}, {transform_indices = @transform_3, window_bounds = array<i64: 1, 1, 128>}]} {
    %c0 = arith.constant 0 : index
    %c0_0 = arith.constant 0 : index
    %0 = vector.load %arg2[%c0, %c0_0] : memref<8x16xf32, #tpu.memory_space<vmem>>, vector<8x16xf32>
    %c0_1 = arith.constant 0 : index
    %c0_2 = arith.constant 0 : index
    %1 = vector.load %arg3[%c0_1, %c0_2] : memref<8x1xi32, #tpu.memory_space<vmem>>, vector<8x1xi32>
    %2 = tpu.iota {dimensions = array<i32: 1>} : vector<8x16xi32>
    %3 = vector.broadcast %1 : vector<8x1xi32> to vector<8x16xi32>
    %4 = arith.cmpi eq, %2, %3 : vector<8x16xi32>
    %cst = arith.constant 0.000000e+00 : f32
    %5 = vector.broadcast %cst : f32 to vector<8x16xf32>
    %6 = arith.select %4, %0, %5 : vector<8x16xi1>, vector<8x16xf32>
    %cst_3 = arith.constant dense<0.000000e+00> : vector<8xf32>
    %7 = vector.multi_reduction <add>, %6, %cst_3 [1] : vector<8x16xf32> to vector<8xf32>
    %8 = vector.shape_cast %7 : vector<8xf32> to vector<8x1xf32>
    %cst_4 = arith.constant 0.000000e+00 : f32
    %9 = vector.broadcast %cst_4 : f32 to vector<8x16xf32>
    %10 = arith.select %4, %9, %0 : vector<8x16xi1>, vector<8x16xf32>
    %cst_5 = arith.constant dense<0xFF800000> : vector<8xf32>
    %11 = vector.multi_reduction <maximumf>, %10, %cst_5 [1] : vector<8x16xf32> to vector<8xf32>
    %12 = vector.shape_cast %11 : vector<8xf32> to vector<8x1xf32>
    %c0_6 = arith.constant 0 : index
    %13 = memref.load %arg1[%c0_6] : memref<1xf32, #tpu.memory_space<smem>>
    %14 = arith.subf %8, %12 : vector<8x1xf32>
    %15 = vector.broadcast %13 : f32 to vector<8x1xf32>
    %16 = arith.addf %14, %15 : vector<8x1xf32>
    %cst_7 = arith.constant 0.000000e+00 : f32
    %17 = vector.broadcast %cst_7 : f32 to vector<8x1xf32>
    %18 = arith.maximumf %16, %17 : vector<8x1xf32>
    %19 = vector.shape_cast %18 : vector<8x1xf32> to vector<1x8x1xf32>
    %cst_8 = arith.constant dense<0.000000e+00> : vector<1xf32>
    %20 = vector.multi_reduction <add>, %19, %cst_8 [1, 2] : vector<1x8x1xf32> to vector<1xf32>
    %21 = vector.shape_cast %20 : vector<1xf32> to vector<1x1x1xf32>
    %22 = vector.extract %21[0, 0, 0] : f32 from vector<1x1x1xf32>
    %cst_9 = arith.constant 0.000000e+00 : f32
    %23 = arith.subf %cst_9, %22 : f32
    %24 = vector.broadcast %23 : f32 to vector<1x1x128xf32>
    %c0_10 = arith.constant 0 : index
    %c0_11 = arith.constant 0 : index
    %c0_12 = arith.constant 0 : index
    %25 = vector.load %arg4[%c0_10, %c0_11, %c0_12] : memref<1x1x128xf32, #tpu.memory_space<vmem>>, vector<1x1x128xf32>
    tpu.vector_store %arg4[%c0_10, %c0_11, %c0_12], %24 {strides = array<i32>} : memref<1x1x128xf32, #tpu.memory_space<vmem>>, vector<1x1x128xf32>,
    return
  }
  func.func @transform_0(%arg0: i32) -> i32 {
    %c0_i32 = arith.constant 0 : i32
    %c0_i32_0 = arith.constant 0 : i32
    return %c0_i32 : i32
  }
  func.func @transform_1(%arg0: i32) -> (i32, i32) {
    %c0_i32 = arith.constant 0 : i32
    %c0_i32_0 = arith.constant 0 : i32
    return %arg0, %c0_i32 : i32, i32
  }
  func.func @transform_2(%arg0: i32) -> (i32, i32) {
    %c0_i32 = arith.constant 0 : i32
    %c0_i32_0 = arith.constant 0 : i32
    return %arg0, %c0_i32 : i32, i32
  }
  func.func @transform_3(%arg0: i32) -> (i32, i32, i32) {
    %c0_i32 = arith.constant 0 : i32
    %c0_i32_0 = arith.constant 0 : i32
    %c0_i32_1 = arith.constant 0 : i32
    return %arg0, %c0_i32, %c0_i32_0 : i32, i32, i32
  }
}

</mosaic_0001>

<llo_original>
// kernel: tpu_custom_call.1
$region0: #{tpu_custom_call.1}
  #allocation0 [shape = 'u32[]', space=smem, size = 0x4, offset = 0x4, fixed_abs, tag = 'smem constant byte address 0x4 - core index']
  #allocation1 [shape = 'u32[144,128]{1,0:T(1,128)}', space=vmem, size = 0x12000, scoped, tag = 'internal scratch']
  #allocation2 [shape = 'f32[1]{0:T(128)S(6)}', space=smem, size = 0x200, scoped, tag = 'scoped memory for tpu_custom_call.1']
  %s0 = inlined_call_operand.<no memory space> [shape: f32[1], index: 0, kind: input, shape index: {}]
  %s1 = inlined_call_operand.vmem [shape: f32[8,16], index: 1, kind: input, shape index: {}]
  %s2 = inlined_call_operand.vmem [shape: s32[8,1], index: 2, kind: input, shape index: {}]
  %s3 = inlined_call_operand.hbm [shape: f32[1,1,128], index: 3, kind: output, shape index: {}]
  %s4 = sld [smem:[#allocation0]]
  $region22: #{tpu_custom_call.1} parent=0
    _
  %s6 = ssub.s32 1, %s4
  %s7 = scalar_select 0, %s6, %s4
  %8 = sst [smem:[#allocation2]] %s0
  $region1: #{tpu_custom_call.1} parent=0
    #allocation3 [shape = 'u8[512]{0}', space=vmem, size = 0x400, scoped, tag = 'output window, operand 0, single buffered']
    #allocation4 [shape = 's32[1]{0}', space=sflag, size = 0x4, scoped, tag = 'scoped memory for tpu_custom_call.1']
    %9 = vsyncpa [#allocation4], 0
    // Predicated region
    $region2: #{tpu_custom_call.1} parent=1 // pred_check
      _
    $region3: #{tpu_custom_call.1} parent=1 // pred_check_branch
      %11 = sbr.rel (0) target = $region5
    $region4: #{tpu_custom_call.1} parent=1 // pred_region
      _
    $region5: #{tpu_custom_call.1} parent=1 // pred_fallthru
      _
    // Predicated region
    $region6: #{tpu_custom_call.1} parent=1 // pred_check
      _
    $region7: #{tpu_custom_call.1} parent=1 // pred_check_branch
      %13 = sbr.rel (0) target = $region9
    $region8: #{tpu_custom_call.1} parent=1 // pred_region
      _
    $region9: #{tpu_custom_call.1} parent=1 // pred_fallthru
      _
    // Predicated region
    $region10: #{tpu_custom_call.1} parent=1 // pred_check
      _
    $region11: #{tpu_custom_call.1} parent=1 // pred_check_branch
      %15 = sbr.rel (0) target = $region13
    $region12: #{tpu_custom_call.1} parent=1 // pred_region
      _
    $region13: #{tpu_custom_call.1} parent=1 // pred_fallthru
      _
    %v16 = vld [vmem:[%s1] sm:$0xff]
    %v17 = vld [vmem:[%s2] sm:$0xff]
    %v18 = vlaneseq
    %v19 = vand.u32 %v18, 127
    %20 = vset.pattern.permute.xlu0 0
    %21 = vperm.xlu0 %20, %v17
    %v22 = vpop.permute.xlu0 %21
    %vm23 = vcmp.eq.s32.totalorder %v19, %v22
    %v24 = vsel %vm23, %v16, 0.0
    %vm25 = vcmask 130048
    %v26 = vsel %vm25, %v24, 0.0
    %27 = vadd.xlane.f32.xlu0 %v26
    %v28 = vpop.xlane.xlu0 %27
    %v29 = vsel %vm23, 0.0, %v16
    %v30 = vsel %vm25, %v29, -inf
    %31 = vmax.xlane.f32.xlu0 %v30
    %v32 = vpop.xlane.xlu0 %31
    %s33 = sld [smem:[#allocation2]]
    %v34 = vsub.f32 %v28, %v32
    %v35 = vstv %s33
    %v36 = vadd.f32 %v34, %v35
    %v37 = vmax.f32 %v36, 0.0
    %vm38 = vcmask 7168
    %v39 = vsel %vm38, %v37, 0.0
    %40 = vadd.xlane.f32.xlu0 %v39
    %v41 = vpop.xlane.xlu0 %40
    %v42 = vrot.slane %v41, 4
    %v43 = vadd.f32 %v41, %v42
    %v44 = vrot.slane %v43, 2
    %v45 = vadd.f32 %v43, %v44
    %v46 = vrot.slane %v45, 1
    %v47 = vadd.f32 %v45, %v46
    %s48 = vtos %v47
    %s49 = ssub.f32 0.0, %s48
    %v50 = vstv %s49
    %51 = vst [vmem:[#allocation3] sm:$0x1] %v50
    // Predicated region
    $region14: #{tpu_custom_call.1} parent=1 // pred_check
      _
    $region15: #{tpu_custom_call.1} parent=1 // pred_check_branch
      %53 = sbr.rel (0) target = $region17
    $region16: #{tpu_custom_call.1} parent=1 // pred_region
      %s55 = ssub.s32 16, 16
      %56 = vsyncadd [#allocation4], %s55
      %s58 = sshll.u32 [#allocation3], 4
      %s59 = int_to_ptr.vmem [resolvable:$true] %s58
      %61 = dma.vmem_to_hbm [thread:$0]  %s59, 16, %s3, [#allocation4]
    $region17: #{tpu_custom_call.1} parent=1 // pred_fallthru
      _
    // Predicated region
    $region18: #{tpu_custom_call.1} parent=1 // pred_check
      _
    $region19: #{tpu_custom_call.1} parent=1 // pred_check_branch
      %63 = sbr.rel (0) target = $region21
    $region20: #{tpu_custom_call.1} parent=1 // pred_region
      %64 = dma.done [#allocation4], 16
    $region21: #{tpu_custom_call.1} parent=1 // pred_fallthru
      _
    %65 = vsyncpa [#allocation4], 1

</llo_original>
